<compile_context>
chip_gen: v7x
topology: tpu7x:2x2x1
jax: 0.10.0
libtpu: 0.0.40
codegen_flags: <defaults>
</compile_context>

<pallas_src>
import jax
import jax.numpy as jnp
from jax import lax
from jax.experimental import pallas as pl
from jax.experimental.pallas import tpu as pltpu


def _model_kernel(ids_ref, emb_ref, w_ref, b_ref, out_ref, acc_ref):
    kv = pl.program_id(1)
    tb, L = ids_ref.shape
    tv = emb_ref.shape[0]

    @pl.when(kv == 0)
    def _init():
        acc_ref[...] = jnp.zeros_like(acc_ref)

    ids = ids_ref[...]                                           # (tb, L) int32
    # Global token ids covered by this embedding tile.
    tile_ids = lax.broadcasted_iota(jnp.int32, (tb, tv), 1) + kv * tv

    # counts[b, v] = #occurrences of token (kv*tv + v) in sequence b.
    # Built with L 2-D compares; never materializes a (tb, L, tv) tensor.
    counts = jnp.zeros((tb, tv), jnp.float32)
    for l in range(L):  # statically unrolled over the (small, static) sequence length
        counts = counts + (ids[:, l:l + 1] == tile_ids).astype(jnp.float32)

    # Accumulate sum_L of embeddings for this V tile (bf16 MXU operands, f32 acc).
    # counts are small integers -> exact in bf16.
    acc_ref[...] += jnp.dot(counts.astype(emb_ref.dtype), emb_ref[...],
                            preferred_element_type=jnp.float32)

    @pl.when(kv == pl.num_programs(1) - 1)
    def _finalize():
        # classify: 1/L (AvgPool) is folded into w on the host; padded class columns
        # have zero weight and -1e30 bias so they get exactly zero softmax mass.
        logits = jnp.dot(acc_ref[...], w_ref[...],
                         preferred_element_type=jnp.float32) + b_ref[...]   # (tb, 128)
        m = jnp.max(logits, axis=1, keepdims=True)
        e = jnp.exp(logits - m)
        out_ref[...] = e / jnp.sum(e, axis=1, keepdims=True)


def torch_model_forward(ids, emb_table, w, b, *, tb=None, tv=None,
                        emb_dtype=jnp.bfloat16):
    """TorchModel.forward (inference).

    ids:       (B, L) int32 token ids
    emb_table: (V, D) f32 embedding weights (D == vector_dim == hidden_size)
    w:         (3, D) f32 classify weight (nn.Linear(D, 3).weight)
    b:         (3,)   f32 classify bias
    returns:   (B, 3) f32 softmax probabilities
    """
    B, L = ids.shape
    V, D = emb_table.shape
    n_cls = w.shape[0]
    LANES = 128

    # --- tile sizes -------------------------------------------------------
    if tv is None:
        tv = min(max(V, 8), 512)
        tv = ((tv + 7) // 8) * 8          # sublane-aligned V tile
    if tb is None:
        if B % 128 == 0:
            tb = 128
        elif B % 8 == 0:
            tb = 8
        else:
            tb = B                        # small batches: one full-batch tile

    v_pad = pl.cdiv(V, tv) * tv
    nb = pl.cdiv(B, tb)
    nv = v_pad // tv

    # --- host-side packing --------------------------------------------------
    ids = ids.astype(jnp.int32)
    # Zero-pad the table along V so every (tv, D) tile is fully in-bounds; padded
    # rows contribute exactly zero (their token ids never occur).
    emb = jnp.zeros((v_pad, D), emb_dtype).at[:V, :].set(emb_table.astype(emb_dtype))
    # classify weight: transpose, fold 1/L (AvgPool) in, zero-pad classes to 128 lanes.
    w_pad = jnp.zeros((D, LANES), jnp.float32).at[:, :n_cls].set(
        w.T.astype(jnp.float32) / L)
    # bias: real classes keep their bias; padded classes get -1e30 -> zero softmax mass.
    b_pad = jnp.full((1, LANES), -1e30, jnp.float32).at[0, :n_cls].set(
        b.astype(jnp.float32))

    grid_spec = pltpu.PrefetchScalarGridSpec(
        num_scalar_prefetch=0,
        grid=(nb, nv),
        in_specs=[
            pl.BlockSpec((tb, L), lambda i, k: (i, 0)),        # ids
            pl.BlockSpec((tv, D), lambda i, k: (k, 0)),        # embedding tile (streamed)
            pl.BlockSpec((D, LANES), lambda i, k: (0, 0)),     # classify weight (resident)
            pl.BlockSpec((1, LANES), lambda i, k: (0, 0)),     # classify bias (resident)
        ],
        out_specs=pl.BlockSpec((tb, LANES), lambda i, k: (i, 0)),
        scratch_shapes=[pltpu.VMEM((tb, D), jnp.float32)],      # pooled-sum accumulator
    )

    emb_bytes = jnp.dtype(emb_dtype).itemsize
    est = (2 * (tb * L * 4 + tv * D * emb_bytes + D * LANES * 4 + LANES * 4
                + tb * LANES * 4) + tb * D * 4)
    vmem_limit = int(min(48 * 2 ** 20, max(16 * 2 ** 20, 4 * est)))

    out = pl.pallas_call(
        _model_kernel,
        out_shape=jax.ShapeDtypeStruct((B, LANES), jnp.float32),
        grid_spec=grid_spec,
        compiler_params=pltpu.CompilerParams(
            dimension_semantics=("parallel", "arbitrary"),
            vmem_limit_bytes=vmem_limit,
        ),
    )(ids, emb, w_pad, b_pad)

    return out[:, :n_cls]


def _reference_forward(ids, emb_table, w, b):
    x = emb_table[ids]                       # (B, L, D)
    x = jnp.mean(x, axis=1)                  # AvgPool1d(L) + squeeze -> (B, D)
    logits = x @ w.T + b                     # (B, 3)
    return jax.nn.softmax(logits, axis=1)


if __name__ == "__main__":
    # vocab V=30, vector_dim == hidden_size D=32, sentence_length L=8, batch B=2.
    V, D, L, B = 30, 32, 8, 2

    key = jax.random.PRNGKey(0)
    k_emb, k_w, k_b, k_ids = jax.random.split(key, 4)

    emb_table = jax.random.normal(k_emb, (V, D), dtype=jnp.float32)
    w = jax.random.normal(k_w, (3, D), dtype=jnp.float32) * 0.1   # nn.Linear(D, 3).weight
    b = jax.random.normal(k_b, (3,), dtype=jnp.float32) * 0.1     # nn.Linear(D, 3).bias
    ids = jax.random.randint(k_ids, (B, L), 0, V, dtype=jnp.int32)

    # tv=16 so even the toy run exercises the V-streaming reduction (V padded 30->32, 2 tiles).
    out = torch_model_forward(ids, emb_table, w, b, tv=16)
    out = jax.block_until_ready(out)

    # The kernel streams the table in bf16 (f32 accumulation), so the reference uses the
    # same bf16-quantized table; remaining differences are f32 reassociation (~1e-7).
    emb_q = emb_table.astype(jnp.bfloat16).astype(jnp.float32)
    ref = _reference_forward(ids, emb_q, w, b)

    assert out.shape == (B, 3)
    assert jnp.allclose(out, ref, atol=1e-5, rtol=1e-5)

    print("KERNEL_OK")
</pallas_src>

<mosaic_0001>
module attributes {stable_mosaic.version = 11 : i64} {
  func.func @_model_kernel(%arg0: i32, %arg1: i32, %arg2: memref<2x8xi32, #tpu.memory_space<vmem>>, %arg3: memref<16x32xbf16, #tpu.memory_space<vmem>>, %arg4: memref<32x128xf32, #tpu.memory_space<vmem>>, %arg5: memref<1x128xf32, #tpu.memory_space<vmem>>, %arg6: memref<2x128xf32, #tpu.memory_space<vmem>>, %arg7: memref<2x32xf32, #tpu.memory_space<vmem>>) attributes {dimension_semantics = [#tpu.dimension_semantics<parallel>, #tpu.dimension_semantics<arbitrary>], iteration_bounds = array<i64: 1, 2>, scalar_prefetch = 0 : i64, scratch_operands = 1 : i64, tpu.core_type = #tpu.core_type<tc>, window_params = [{transform_indices = @transform_0, window_bounds = array<i64: 2, 8>}, {transform_indices = @transform_1, window_bounds = array<i64: 16, 32>}, {pipeline_mode = #tpu.pipeline_mode<synchronous>, transform_indices = @transform_2, window_bounds = array<i64: 32, 128>}, {pipeline_mode = #tpu.pipeline_mode<synchronous>, transform_indices = @transform_3, window_bounds = array<i64: 1, 128>}, {transform_indices = @transform_4, window_bounds = array<i64: 2, 128>}]} {
    %c0_i32 = arith.constant 0 : i32
    %0 = arith.cmpi eq, %arg1, %c0_i32 : i32
    %1 = arith.extui %0 : i1 to i32
    %c0_i32_0 = arith.constant 0 : i32
    %2 = arith.cmpi ne, %1, %c0_i32_0 : i32
    scf.if %2 {
      %cst_10 = arith.constant 0.000000e+00 : f32
      %66 = vector.broadcast %cst_10 : f32 to vector<2x32xf32>
      %c0_11 = arith.constant 0 : index
      %c0_12 = arith.constant 0 : index
      %67 = vector.load %arg7[%c0_11, %c0_12] : memref<2x32xf32, #tpu.memory_space<vmem>>, vector<2x32xf32>
      tpu.vector_store %arg7[%c0_11, %c0_12], %66 {strides = array<i32>} : memref<2x32xf32, #tpu.memory_space<vmem>>, vector<2x32xf32>,
    } else {
    }
    %c0 = arith.constant 0 : index
    %c0_1 = arith.constant 0 : index
    %3 = vector.load %arg2[%c0, %c0_1] : memref<2x8xi32, #tpu.memory_space<vmem>>, vector<2x8xi32>
    %4 = tpu.iota {dimensions = array<i32: 1>} : vector<2x16xi32>
    %c16_i32 = arith.constant 16 : i32
    %5 = arith.muli %arg1, %c16_i32 : i32
    %6 = vector.broadcast %5 : i32 to vector<2x16xi32>
    %7 = arith.addi %4, %6 : vector<2x16xi32>
    %cst = arith.constant 0.000000e+00 : f32
    %8 = vector.broadcast %cst : f32 to vector<2x16xf32>
    %9 = vector.extract_strided_slice %3 {offsets = [0, 0], sizes = [2, 1], strides = [1, 1]} : vector<2x8xi32> to vector<2x1xi32>
    %10 = vector.broadcast %9 : vector<2x1xi32> to vector<2x16xi32>
    %11 = arith.cmpi eq, %10, %7 : vector<2x16xi32>
    %12 = arith.extui %11 : vector<2x16xi1> to vector<2x16xi32>
    %13 = arith.sitofp %12 : vector<2x16xi32> to vector<2x16xf32>
    %14 = arith.addf %8, %13 : vector<2x16xf32>
    %15 = vector.extract_strided_slice %3 {offsets = [0, 1], sizes = [2, 1], strides = [1, 1]} : vector<2x8xi32> to vector<2x1xi32>
    %16 = vector.broadcast %15 : vector<2x1xi32> to vector<2x16xi32>
    %17 = arith.cmpi eq, %16, %7 : vector<2x16xi32>
    %18 = arith.extui %17 : vector<2x16xi1> to vector<2x16xi32>
    %19 = arith.sitofp %18 : vector<2x16xi32> to vector<2x16xf32>
    %20 = arith.addf %14, %19 : vector<2x16xf32>
    %21 = vector.extract_strided_slice %3 {offsets = [0, 2], sizes = [2, 1], strides = [1, 1]} : vector<2x8xi32> to vector<2x1xi32>
    %22 = vector.broadcast %21 : vector<2x1xi32> to vector<2x16xi32>
    %23 = arith.cmpi eq, %22, %7 : vector<2x16xi32>
    %24 = arith.extui %23 : vector<2x16xi1> to vector<2x16xi32>
    %25 = arith.sitofp %24 : vector<2x16xi32> to vector<2x16xf32>
    %26 = arith.addf %20, %25 : vector<2x16xf32>
    %27 = vector.extract_strided_slice %3 {offsets = [0, 3], sizes = [2, 1], strides = [1, 1]} : vector<2x8xi32> to vector<2x1xi32>
    %28 = vector.broadcast %27 : vector<2x1xi32> to vector<2x16xi32>
    %29 = arith.cmpi eq, %28, %7 : vector<2x16xi32>
    %30 = arith.extui %29 : vector<2x16xi1> to vector<2x16xi32>
    %31 = arith.sitofp %30 : vector<2x16xi32> to vector<2x16xf32>
    %32 = arith.addf %26, %31 : vector<2x16xf32>
    %33 = vector.extract_strided_slice %3 {offsets = [0, 4], sizes = [2, 1], strides = [1, 1]} : vector<2x8xi32> to vector<2x1xi32>
    %34 = vector.broadcast %33 : vector<2x1xi32> to vector<2x16xi32>
    %35 = arith.cmpi eq, %34, %7 : vector<2x16xi32>
    %36 = arith.extui %35 : vector<2x16xi1> to vector<2x16xi32>
    %37 = arith.sitofp %36 : vector<2x16xi32> to vector<2x16xf32>
    %38 = arith.addf %32, %37 : vector<2x16xf32>
    %39 = vector.extract_strided_slice %3 {offsets = [0, 5], sizes = [2, 1], strides = [1, 1]} : vector<2x8xi32> to vector<2x1xi32>
    %40 = vector.broadcast %39 : vector<2x1xi32> to vector<2x16xi32>
    %41 = arith.cmpi eq, %40, %7 : vector<2x16xi32>
    %42 = arith.extui %41 : vector<2x16xi1> to vector<2x16xi32>
    %43 = arith.sitofp %42 : vector<2x16xi32> to vector<2x16xf32>
    %44 = arith.addf %38, %43 : vector<2x16xf32>
    %45 = vector.extract_strided_slice %3 {offsets = [0, 6], sizes = [2, 1], strides = [1, 1]} : vector<2x8xi32> to vector<2x1xi32>
    %46 = vector.broadcast %45 : vector<2x1xi32> to vector<2x16xi32>
    %47 = arith.cmpi eq, %46, %7 : vector<2x16xi32>
    %48 = arith.extui %47 : vector<2x16xi1> to vector<2x16xi32>
    %49 = arith.sitofp %48 : vector<2x16xi32> to vector<2x16xf32>
    %50 = arith.addf %44, %49 : vector<2x16xf32>
    %51 = vector.extract_strided_slice %3 {offsets = [0, 7], sizes = [2, 1], strides = [1, 1]} : vector<2x8xi32> to vector<2x1xi32>
    %52 = vector.broadcast %51 : vector<2x1xi32> to vector<2x16xi32>
    %53 = arith.cmpi eq, %52, %7 : vector<2x16xi32>
    %54 = arith.extui %53 : vector<2x16xi1> to vector<2x16xi32>
    %55 = arith.sitofp %54 : vector<2x16xi32> to vector<2x16xf32>
    %56 = arith.addf %50, %55 : vector<2x16xf32>
    %c0_2 = arith.constant 0 : index
    %c0_3 = arith.constant 0 : index
    %57 = vector.load %arg7[%c0_2, %c0_3] : memref<2x32xf32, #tpu.memory_space<vmem>>, vector<2x32xf32>
    %58 = arith.truncf %56 : vector<2x16xf32> to vector<2x16xbf16>
    %c0_4 = arith.constant 0 : index
    %c0_5 = arith.constant 0 : index
    %59 = vector.load %arg3[%c0_4, %c0_5] : memref<16x32xbf16, #tpu.memory_space<vmem>>, vector<16x32xbf16>
    %cst_6 = arith.constant dense<0.000000e+00> : vector<2x32xf32>
    %60 = tpu.matmul %58, %59, %cst_6 {dimension_numbers = #tpu.dot_dimension_numbers<[1], [0], [0], [1], [0, 0, 1, 1], [], []>} : vector<2x16xbf16>, vector<16x32xbf16>, vector<2x32xf32> -> vector<2x32xf32>
    %61 = arith.addf %57, %60 : vector<2x32xf32>
    %c0_7 = arith.constant 0 : index
    %c0_8 = arith.constant 0 : index
    %62 = vector.load %arg7[%c0_7, %c0_8] : memref<2x32xf32, #tpu.memory_space<vmem>>, vector<2x32xf32>
    tpu.vector_store %arg7[%c0_7, %c0_8], %61 {strides = array<i32>} : memref<2x32xf32, #tpu.memory_space<vmem>>, vector<2x32xf32>,
    %c1_i32 = arith.constant 1 : i32
    %63 = arith.cmpi eq, %arg1, %c1_i32 : i32
    %64 = arith.extui %63 : i1 to i32
    %c0_i32_9 = arith.constant 0 : i32
    %65 = arith.cmpi ne, %64, %c0_i32_9 : i32
    scf.if %65 {
      %c0_10 = arith.constant 0 : index
      %c0_11 = arith.constant 0 : index
      %66 = vector.load %arg7[%c0_10, %c0_11] : memref<2x32xf32, #tpu.memory_space<vmem>>, vector<2x32xf32>
      %c0_12 = arith.constant 0 : index
      %c0_13 = arith.constant 0 : index
      %67 = vector.load %arg4[%c0_12, %c0_13] : memref<32x128xf32, #tpu.memory_space<vmem>>, vector<32x128xf32>
      %cst_14 = arith.constant dense<0.000000e+00> : vector<2x128xf32>
      %68 = tpu.matmul %66, %67, %cst_14 {dimension_numbers = #tpu.dot_dimension_numbers<[1], [0], [0], [1], [0, 0, 1, 1], [], []>} : vector<2x32xf32>, vector<32x128xf32>, vector<2x128xf32> -> vector<2x128xf32>
      %c0_15 = arith.constant 0 : index
      %c0_16 = arith.constant 0 : index
      %69 = vector.load %arg5[%c0_15, %c0_16] : memref<1x128xf32, #tpu.memory_space<vmem>>, vector<1x128xf32>
      %70 = vector.broadcast %69 : vector<1x128xf32> to vector<2x128xf32>
      %71 = arith.addf %68, %70 : vector<2x128xf32>
      %cst_17 = arith.constant dense<0xFF800000> : vector<2xf32>
      %72 = vector.multi_reduction <maximumf>, %71, %cst_17 [1] : vector<2x128xf32> to vector<2xf32>
      %73 = vector.shape_cast %72 : vector<2xf32> to vector<2x1xf32>
      %74 = vector.broadcast %73 : vector<2x1xf32> to vector<2x128xf32>
      %75 = arith.subf %71, %74 : vector<2x128xf32>
      %76 = math.exp %75 : vector<2x128xf32>
      %cst_18 = arith.constant dense<0.000000e+00> : vector<2xf32>
      %77 = vector.multi_reduction <add>, %76, %cst_18 [1] : vector<2x128xf32> to vector<2xf32>
      %78 = vector.shape_cast %77 : vector<2xf32> to vector<2x1xf32>
      %79 = vector.broadcast %78 : vector<2x1xf32> to vector<2x128xf32>
      %80 = arith.divf %76, %79 : vector<2x128xf32>
      %c0_19 = arith.constant 0 : index
      %c0_20 = arith.constant 0 : index
      %81 = vector.load %arg6[%c0_19, %c0_20] : memref<2x128xf32, #tpu.memory_space<vmem>>, vector<2x128xf32>
      tpu.vector_store %arg6[%c0_19, %c0_20], %80 {strides = array<i32>} : memref<2x128xf32, #tpu.memory_space<vmem>>, vector<2x128xf32>,
    } else {
    }
    return
  }
  func.func @transform_0(%arg0: i32, %arg1: i32) -> (i32, i32) {
    %c0_i32 = arith.constant 0 : i32
    %c0_i32_0 = arith.constant 0 : i32
    return %arg0, %c0_i32 : i32, i32
  }
  func.func @transform_1(%arg0: i32, %arg1: i32) -> (i32, i32) {
    %c0_i32 = arith.constant 0 : i32
    %c0_i32_0 = arith.constant 0 : i32
    return %arg1, %c0_i32 : i32, i32
  }
  func.func @transform_2(%arg0: i32, %arg1: i32) -> (i32, i32) {
    %c0_i32 = arith.constant 0 : i32
    %c0_i32_0 = arith.constant 0 : i32
    %c0_i32_1 = arith.constant 0 : i32
    return %c0_i32, %c0_i32_0 : i32, i32
  }
  func.func @transform_3(%arg0: i32, %arg1: i32) -> (i32, i32) {
    %c0_i32 = arith.constant 0 : i32
    %c0_i32_0 = arith.constant 0 : i32
    %c0_i32_1 = arith.constant 0 : i32
    return %c0_i32, %c0_i32_0 : i32, i32
  }
  func.func @transform_4(%arg0: i32, %arg1: i32) -> (i32, i32) {
    %c0_i32 = arith.constant 0 : i32
    %c0_i32_0 = arith.constant 0 : i32
    return %arg0, %c0_i32 : i32, i32
  }
}

</mosaic_0001>

<llo_original>
// kernel: tpu_custom_call.1
$region0: #{tpu_custom_call.1}
  #allocation0 [shape = 'u32[]', space=smem, size = 0x4, offset = 0x4, fixed_abs, tag = 'smem constant byte address 0x4 - core index']
  #allocation1 [shape = 'u32[144,128]{1,0:T(1,128)}', space=vmem, size = 0x12000, scoped, tag = 'internal scratch']
  #allocation2 [shape = 'f32[2,32]{1,0:T(2,128)}', space=vmem, size = 0x400, scoped, tag = 'scratch operand']
  %s0 = inlined_call_operand.hbm [shape: s32[2,8], index: 0, kind: input, shape index: {}]
  %s1 = inlined_call_operand.hbm [shape: bf16[32,32], index: 1, kind: input, shape index: {}]
  %s2 = inlined_call_operand.hbm [shape: f32[32,128], index: 2, kind: input, shape index: {}]
  %s3 = inlined_call_operand.vmem [shape: f32[1,128], index: 3, kind: input, shape index: {}]
  %s4 = inlined_call_operand.hbm [shape: f32[2,128], index: 4, kind: output, shape index: {}]
  %s5 = sld [smem:[#allocation0]]
  $region69: #{tpu_custom_call.1} parent=0
    _
  %s7 = ssub.s32 1, %s5
  %s8 = scalar_select 0, %s7, %s5
  $region1: #{tpu_custom_call.1} parent=0
    #allocation3 [shape = 'u8[1024]{0}', space=vmem, size = 0x400, scoped, tag = 'input window, operand 0, single buffered']
    #allocation4 [shape = 's32[2]{0}', space=sflag, size = 0x8, scoped, tag = 'scoped memory for tpu_custom_call.1']
    #allocation5 [shape = 's32[2]{0}', space=sflag, size = 0x8, scoped, tag = 'scoped memory for tpu_custom_call.1']
    #allocation6 [shape = 'u8[8192]{0}', space=vmem, size = 0x2000, scoped, tag = 'input window, operand 1']
    #allocation7 [shape = 's32[2]{0}', space=sflag, size = 0x8, scoped, tag = 'scoped memory for tpu_custom_call.1']
    #allocation8 [shape = 'u8[16384]{0}', space=vmem, size = 0x4000, scoped, tag = 'input window, operand 2, single buffered']
    #allocation9 [shape = 'u8[1024]{0}', space=vmem, size = 0x400, scoped, tag = 'output window, operand 0, single buffered']
    %9 = vsyncpa [#allocation4], 0
    %10 = vsyncpa [#allocation7], 0
    %s11 = scalar_lea.sflag [#allocation7], 1
    %12 = vsyncpa %s11, 0
    %13 = vsyncpa [#allocation5], 0
    loop: start=0, step=1, limit=4
    $region2: #{tpu_custom_call.1} parent=1 // loop_pre_header
      _
    $region3: #{tpu_custom_call.1} parent=1 // loop_header
      %s15 = sphi 0, %s19
      %p16 = scmp.ge.s32.totalorder %s15, 4
      %s22 = sphi 0, %s34
      %s23 = sphi 0, %s30
      %s24 = sphi 0, %s22
      %s25 = sphi 0, %s23
      %s26 = sphi 0, %s24
      %s27 = sphi 0, %s25
      %s37 = sphi 0, %s39
      %s40 = sphi 0, %s37
      %s41 = sphi 0, %s40
      %s57 = sphi 0, %s41
      %s63 = sphi 0, %s65
      %s66 = sphi 0, %s63
      %s67 = sphi 0, %s66
      %s83 = sphi 0, %s67
      %s87 = sphi 0, %s87
      %s89 = sphi 0, %s87
      %s90 = sphi 0, %s89
      %s104 = sphi 0, %s90
      %s108 = sphi 0, %s108
      %s110 = sphi 0, %s108
      %s111 = sphi 0, %s110
      %s125 = sphi 0, %s111
      %s131 = sphi 0, %s133
      %s134 = sphi 0, %s131
      %s135 = sphi 0, %s134
      %s151 = sphi 0, %s135
    $region4: #{tpu_custom_call.1} parent=1 // loop_header_branch
      %18 = sbr.rel (%p16) target = $region8
    $region5: #{tpu_custom_call.1} parent=1 // loop_body
      %s20 = ssub.s32 %s15, 1
      %s21 = ssub.s32 %s15, 2
      %s28 = sadd.s32 1, %s23
      %p29 = scmp.ge.s32.totalorder %s28, 2
      %s30 = scalar_select %p29, 0, %s28
      %s31 = sadd.s32 1, %s22
      %s32 = scalar_select %p29, %s31, %s22
      %p33 = scmp.ge.s32.totalorder %s32, 1
      %s34 = scalar_select %p33, 0, %s32
      %s35 = ssub.s32 %s22, %s34
      %p36 = scmp.eq.s32.totalorder %s35, 0
      %s38 = sadd.s32 %s37, 1
      %s39 = scalar_select %p36, %s37, %s38
      %p42 = pneg %p36
      %p43 = scmp.eq.s32.totalorder %s15, 1
      %p44 = por %p42, %p43
      %p45 = scmp.ne.s32.totalorder %s37, %s40
      %p46 = scmp.eq.s32.totalorder %s15, 0
      %p47 = por %p45, %p46
      %p48 = scmp.ne.s32.totalorder %s37, %s40
      %p49 = scmp.eq.s32.totalorder %s20, 1
      %p50 = por %p48, %p49
      %p51 = scmp.ne.s32.totalorder %s40, %s41
      %p52 = scmp.eq.s32.totalorder %s20, 0
      %p53 = por %p51, %p52
      %p54 = scmp.ne.s32.totalorder %s40, %s41
      %p55 = scmp.eq.s32.totalorder %s21, 1
      %p56 = por %p54, %p55
      %p58 = scmp.ne.s32.totalorder %s41, %s57
      %p59 = scmp.eq.s32.totalorder %s21, 0
      %p60 = por %p58, %p59
      %s61 = ssub.s32 %s23, %s30
      %p62 = scmp.eq.s32.totalorder %s61, 0
      %s64 = sadd.s32 %s63, 1
      %s65 = scalar_select %p62, %s63, %s64
      %p68 = pneg %p62
      %p69 = scmp.eq.s32.totalorder %s15, 1
      %p70 = por %p68, %p69
      %p71 = scmp.ne.s32.totalorder %s63, %s66
      %p72 = scmp.eq.s32.totalorder %s15, 0
      %p73 = por %p71, %p72
      %p74 = scmp.ne.s32.totalorder %s63, %s66
      %p75 = scmp.eq.s32.totalorder %s20, 1
      %p76 = por %p74, %p75
      %p77 = scmp.ne.s32.totalorder %s66, %s67
      %p78 = scmp.eq.s32.totalorder %s20, 0
      %p79 = por %p77, %p78
      %p80 = scmp.ne.s32.totalorder %s66, %s67
      %p81 = scmp.eq.s32.totalorder %s21, 1
      %p82 = por %p80, %p81
      %p84 = scmp.ne.s32.totalorder %s67, %s83
      %p85 = scmp.eq.s32.totalorder %s21, 0
      %p86 = por %p84, %p85
      %s88 = sadd.s32 %s87, 1
      %p91 = scmp.eq.s32.totalorder %s15, 1
      %p92 = scmp.ne.s32.totalorder %s87, %s89
      %p93 = scmp.eq.s32.totalorder %s15, 0
      %p94 = por %p92, %p93
      %p95 = scmp.ne.s32.totalorder %s87, %s89
      %p96 = scmp.eq.s32.totalorder %s20, 1
      %p97 = por %p95, %p96
      %p98 = scmp.ne.s32.totalorder %s89, %s90
      %p99 = scmp.eq.s32.totalorder %s20, 0
      %p100 = por %p98, %p99
      %p101 = scmp.ne.s32.totalorder %s89, %s90
      %p102 = scmp.eq.s32.totalorder %s21, 1
      %p103 = por %p101, %p102
      %p105 = scmp.ne.s32.totalorder %s90, %s104
      %p106 = scmp.eq.s32.totalorder %s21, 0
      %p107 = por %p105, %p106
      %s109 = sadd.s32 %s108, 1
      %p112 = scmp.eq.s32.totalorder %s15, 1
      %p113 = scmp.ne.s32.totalorder %s108, %s110
      %p114 = scmp.eq.s32.totalorder %s15, 0
      %p115 = por %p113, %p114
      %p116 = scmp.ne.s32.totalorder %s108, %s110
      %p117 = scmp.eq.s32.totalorder %s20, 1
      %p118 = por %p116, %p117
      %p119 = scmp.ne.s32.totalorder %s110, %s111
      %p120 = scmp.eq.s32.totalorder %s20, 0
      %p121 = por %p119, %p120
      %p122 = scmp.ne.s32.totalorder %s110, %s111
      %p123 = scmp.eq.s32.totalorder %s21, 1
      %p124 = por %p122, %p123
      %p126 = scmp.ne.s32.totalorder %s111, %s125
      %p127 = scmp.eq.s32.totalorder %s21, 0
      %p128 = por %p126, %p127
      %s129 = ssub.s32 %s22, %s34
      %p130 = scmp.eq.s32.totalorder %s129, 0
      %s132 = sadd.s32 %s131, 1
      %s133 = scalar_select %p130, %s131, %s132
      %p136 = pneg %p130
      %p137 = scmp.eq.s32.totalorder %s15, 1
      %p138 = por %p136, %p137
      %p139 = scmp.ne.s32.totalorder %s131, %s134
      %p140 = scmp.eq.s32.totalorder %s15, 0
      %p141 = por %p139, %p140
      %p142 = scmp.ne.s32.totalorder %s131, %s134
      %p143 = scmp.eq.s32.totalorder %s20, 1
      %p144 = por %p142, %p143
      %p145 = scmp.ne.s32.totalorder %s134, %s135
      %p146 = scmp.eq.s32.totalorder %s20, 0
      %p147 = por %p145, %p146
      %p148 = scmp.ne.s32.totalorder %s134, %s135
      %p149 = scmp.eq.s32.totalorder %s21, 1
      %p150 = por %p148, %p149
      %p152 = scmp.ne.s32.totalorder %s135, %s151
      %p153 = scmp.eq.s32.totalorder %s21, 0
      %p154 = por %p152, %p153
      %p155 = scmp.le.s32.totalorder 1, %s15
      %p156 = scmp.lt.s32.totalorder %s15, 3
      %p157 = pnand %p155, %p156
      %p158 = pneg %p157
      // Predicated region
      $region9: #{tpu_custom_call.1} parent=5 // pred_check
        _
      $region10: #{tpu_custom_call.1} parent=5 // pred_check_branch
        %160 = sbr.rel (%p157) target = $region12
      $region11: #{tpu_custom_call.1} parent=5 // pred_region
        %s161 = ssub.s32 %s15, 1
        // Predicated region
        $region13: #{tpu_custom_call.1} parent=11 // pred_check
          %p162 = pneg %p53
        $region14: #{tpu_custom_call.1} parent=11 // pred_check_branch
          %164 = sbr.rel (%p162) target = $region16
        $region15: #{tpu_custom_call.1} parent=11 // pred_region
          %s166 = ssub.s32 32, 32
          %167 = vsyncadd [#allocation4], %s166
          %s168 = smul.addr %s24, 32
          %s169 = scalar_lea.hbm %s0, %s168
          %s171 = sshll.u32 [#allocation3], 4
          %s172 = int_to_ptr.vmem [resolvable:$true] %s171
          %174 = dma.hbm_to_vmem [thread:$0]  %s169, 32, %s172, [#allocation4]
        $region16: #{tpu_custom_call.1} parent=11 // pred_fallthru
          _
        // Predicated region
        $region17: #{tpu_custom_call.1} parent=11 // pred_check
          %p175 = pneg %p100
        $region18: #{tpu_custom_call.1} parent=11 // pred_check_branch
          %177 = sbr.rel (%p175) target = $region20
        $region19: #{tpu_custom_call.1} parent=11 // pred_region
          %s179 = ssub.s32 512, 512
          %180 = vsyncadd [#allocation7], %s179
          %s181 = sshll.u32 [#allocation8], 4
          %s182 = int_to_ptr.vmem [resolvable:$true] %s181
          %187 = dma.hbm_to_vmem [thread:$0]  %s2, 512, %s182, [#allocation7], 128, 128, 8
        $region20: #{tpu_custom_call.1} parent=11 // pred_fallthru
          _
        // Predicated region
        $region21: #{tpu_custom_call.1} parent=11 // pred_check
          %p188 = pneg %p121
        $region22: #{tpu_custom_call.1} parent=11 // pred_check_branch
          %190 = sbr.rel (%p188) target = $region24
        $region23: #{tpu_custom_call.1} parent=11 // pred_region
          _
        $region24: #{tpu_custom_call.1} parent=11 // pred_fallthru
          _
      $region12: #{tpu_custom_call.1} parent=5 // pred_fallthru
        _
      %p191 = scmp.lt.s32.totalorder %s15, 2
      // Predicated region
      $region25: #{tpu_custom_call.1} parent=5 // pred_check
        %p192 = pneg %p191
      $region26: #{tpu_custom_call.1} parent=5 // pred_check_branch
        %194 = sbr.rel (%p192) target = $region28
      $region27: #{tpu_custom_call.1} parent=5 // pred_region
        // Predicated region
        $region29: #{tpu_custom_call.1} parent=27 // pred_check
          %p195 = pneg %p73
        $region30: #{tpu_custom_call.1} parent=27 // pred_check_branch
          %197 = sbr.rel (%p195) target = $region32
        $region31: #{tpu_custom_call.1} parent=27 // pred_region
          %s198 = sand.u32 %s15, 1
          %s199 = scalar_lea.sflag [#allocation7], %s198
          %s200 = sand.u32 %s63, 1
          %s201 = smul.addr %s200, 8
          %s202 = scalar_lea.vmem [#allocation6], %s201
          %s203 = smul.u32 2, %s23
          %s205 = ssub.s32 128, 128
          %206 = vsyncadd %s199, %s205
          %s207 = smul.addr %s203, 64
          %s208 = scalar_lea.hbm %s1, %s207
          %s209 = sshll.u32 %s202, 4
          %s210 = int_to_ptr.vmem [resolvable:$true] %s209
          %215 = dma.hbm_to_vmem [thread:$0]  %s208, 128, %s210, %s199, 64, 64, 4
        $region32: #{tpu_custom_call.1} parent=27 // pred_fallthru
          _
      $region28: #{tpu_custom_call.1} parent=5 // pred_fallthru
        _
      %p216 = scmp.le.s32.totalorder 1, %s15
      %p217 = scmp.lt.s32.totalorder %s15, 3
      %p218 = pnand %p216, %p217
      %p219 = pneg %p218
      // Predicated region
      $region33: #{tpu_custom_call.1} parent=5 // pred_check
        _
      $region34: #{tpu_custom_call.1} parent=5 // pred_check_branch
        %221 = sbr.rel (%p218) target = $region36
      $region35: #{tpu_custom_call.1} parent=5 // pred_region
        %s222 = ssub.s32 %s15, 1
        // Predicated region
        $region37: #{tpu_custom_call.1} parent=35 // pred_check
          %p223 = pneg %p53
        $region38: #{tpu_custom_call.1} parent=35 // pred_check_branch
          %225 = sbr.rel (%p223) target = $region40
        $region39: #{tpu_custom_call.1} parent=35 // pred_region
          %226 = dma.done [#allocation4], 32
        $region40: #{tpu_custom_call.1} parent=35 // pred_fallthru
          _
        %s227 = sand.u32 %s20, 1
        %s228 = scalar_lea.sflag [#allocation7], %s227
        %s229 = sand.u32 %s66, 1
        %s230 = smul.addr %s229, 8
        %s231 = scalar_lea.vmem [#allocation6], %s230
        // Predicated region
        $region41: #{tpu_custom_call.1} parent=35 // pred_check
          %p232 = pneg %p79
        $region42: #{tpu_custom_call.1} parent=35 // pred_check_branch
          %234 = sbr.rel (%p232) target = $region44
        $region43: #{tpu_custom_call.1} parent=35 // pred_region
          %235 = dma.done %s228, 128
        $region44: #{tpu_custom_call.1} parent=35 // pred_fallthru
          _
        // Predicated region
        $region45: #{tpu_custom_call.1} parent=35 // pred_check
          %p236 = pneg %p100
        $region46: #{tpu_custom_call.1} parent=35 // pred_check_branch
          %238 = sbr.rel (%p236) target = $region48
        $region47: #{tpu_custom_call.1} parent=35 // pred_region
          %239 = dma.done [#allocation7], 512
        $region48: #{tpu_custom_call.1} parent=35 // pred_fallthru
          _
        %p240 = pneg %p53
        %p241 = pneg %p50
        %s242 = sand.u32 %s20, 1
        %s243 = scalar_lea.sflag [#allocation7], %s242
        %s244 = sand.u32 %s66, 1
        %s245 = smul.addr %s244, 8
        %s246 = scalar_lea.vmem [#allocation6], %s245
        %p247 = pneg %p79
        %p248 = pneg %p76
        %p249 = pneg %p100
        %p250 = pneg %p97
        %p251 = pneg %p121
        %p252 = pneg %p118
        %p253 = pneg %p147
        %p254 = pneg %p144
        %s255 = smul.u32 2, %s25
        %p257 = scmp.eq.s32.totalorder %s25, 0
        // Predicated region
        $region49: #{tpu_custom_call.1} parent=35 // pred_check
          %p258 = pneg %p257
        $region50: #{tpu_custom_call.1} parent=35 // pred_check_branch
          %260 = sbr.rel (%p258) target = $region52
        $region51: #{tpu_custom_call.1} parent=35 // pred_region
          %vm261 = vcmask 254976
          %262 = vst.msk [vmem:[#allocation2] sm:$0x3] %vm261, 0.0
        $region52: #{tpu_custom_call.1} parent=35 // pred_fallthru
          _
        %v263 = vld [vmem:[#allocation3] sm:$0x3]
        %v264 = vlaneseq
        %v265 = vand.u32 %v264, 127
        %s266 = smul.u32 %s25, 16
        %v267 = vstv %s266
        %v268 = vadd.s32 %v265, %v267
        %269 = vset.pattern.permute.xlu0 0
        %270 = vperm.xlu0 %269, %v263
        %v271 = vpop.permute.xlu0 %270
        %vm272 = vcmp.eq.s32.totalorder %v271, %v268
        %v273 = vsel %vm272, 1, 0
        %v274 = vcvt.s32.f32 %v273
        %v275 = vadd.f32 %v274, 0.0
        %276 = vset.pattern.permute.xlu0 1
        %277 = vperm.xlu0 %276, %v263
        %v278 = vpop.permute.xlu0 %277
        %vm279 = vcmp.eq.s32.totalorder %v278, %v268
        %v280 = vsel %vm279, 1, 0
        %v281 = vcvt.s32.f32 %v280
        %v282 = vadd.f32 %v275, %v281
        %283 = vset.pattern.permute.xlu0 2
        %284 = vperm.xlu0 %283, %v263
        %v285 = vpop.permute.xlu0 %284
        %vm286 = vcmp.eq.s32.totalorder %v285, %v268
        %v287 = vsel %vm286, 1, 0
        %v288 = vcvt.s32.f32 %v287
        %v289 = vadd.f32 %v282, %v288
        %290 = vset.pattern.permute.xlu0 3
        %291 = vperm.xlu0 %290, %v263
        %v292 = vpop.permute.xlu0 %291
        %vm293 = vcmp.eq.s32.totalorder %v292, %v268
        %v294 = vsel %vm293, 1, 0
        %v295 = vcvt.s32.f32 %v294
        %v296 = vadd.f32 %v289, %v295
        %297 = vset.pattern.permute.xlu0 4
        %298 = vperm.xlu0 %297, %v263
        %v299 = vpop.permute.xlu0 %298
        %vm300 = vcmp.eq.s32.totalorder %v299, %v268
        %v301 = vsel %vm300, 1, 0
        %v302 = vcvt.s32.f32 %v301
        %v303 = vadd.f32 %v296, %v302
        %304 = vset.pattern.permute.xlu0 5
        %305 = vperm.xlu0 %304, %v263
        %v306 = vpop.permute.xlu0 %305
        %vm307 = vcmp.eq.s32.totalorder %v306, %v268
        %v308 = vsel %vm307, 1, 0
        %v309 = vcvt.s32.f32 %v308
        %v310 = vadd.f32 %v303, %v309
        %311 = vset.pattern.permute.xlu0 6
        %312 = vperm.xlu0 %311, %v263
        %v313 = vpop.permute.xlu0 %312
        %vm314 = vcmp.eq.s32.totalorder %v313, %v268
        %v315 = vsel %vm314, 1, 0
        %v316 = vcvt.s32.f32 %v315
        %v317 = vadd.f32 %v310, %v316
        %318 = vset.pattern.permute.xlu0 7
        %319 = vperm.xlu0 %318, %v263
        %v320 = vpop.permute.xlu0 %319
        %vm321 = vcmp.eq.s32.totalorder %v320, %v268
        %v322 = vsel %vm321, 1, 0
        %v323 = vcvt.s32.f32 %v322
        %v324 = vadd.f32 %v317, %v323
        %v325 = vld [vmem:[#allocation2] sm:$0x3]
        %v326 = vpack.c.bf16 %v324, %v324
        %v327 = vld [vmem:[%s231] sm:$0xf]
        %v328 = vld [vmem:[%s231 + $0x4] sm:$0xf]
        %v331 = vunpack.c.l.b16 %v327
        %v332 = vunpack.c.l.b16 %v328
        %v333 = vpack.c.b16 %v332, %v331
        %vm335 = vcmask 130048
        %v337 = vsel %vm335, %v326, 0
        %339 = vmatprep.subr.bf16.mxu0 0
        %340 = vmatpush1.bf16.msra.mxu0 %v333
        %341 = vmatprep.subr.bf16.mxu0 0
        %342 = vmatpush1.bf16.msra.mxu0 0
        %343 = vmatprep.subr.bf16.mxu0 0
        %344 = vmatpush1.bf16.msra.mxu0 0
        %345 = vmatprep.subr.bf16.mxu0 0
        %346 = vmatpush1.bf16.msra.mxu0 0
        %347 = vmatprep.subr.bf16.mxu0 0
        %348 = vmatpush1.bf16.msra.mxu0 0
        %349 = vmatprep.subr.bf16.mxu0 0
        %350 = vmatpush1.bf16.msra.mxu0 0
        %351 = vmatprep.subr.bf16.mxu0 0
        %352 = vmatpush1.bf16.msra.mxu0 0
        %353 = vmatprep.subr.bf16.mxu0 0
        %354 = vmatpush1.bf16.msra.mxu0 0
        %355 = vmatprep.subr.bf16.mxu0 0
        %356 = vmatpush1.bf16.msra.mxu0 0
        %357 = vmatprep.subr.bf16.mxu0 0
        %358 = vmatpush1.bf16.msra.mxu0 0
        %359 = vmatprep.subr.bf16.mxu0 0
        %360 = vmatpush1.bf16.msra.mxu0 0
        %361 = vmatprep.subr.bf16.mxu0 0
        %362 = vmatpush1.bf16.msra.mxu0 0
        %363 = vmatprep.subr.bf16.mxu0 0
        %364 = vmatpush1.bf16.msra.mxu0 0
        %365 = vmatprep.subr.bf16.mxu0 0
        %366 = vmatpush1.bf16.msra.mxu0 0
        %367 = vmatprep.subr.bf16.mxu0 0
        %368 = vmatpush1.bf16.msra.mxu0 0
        %369 = vmatprep.subr.bf16.mxu0 0
        %370 = vmatpush1.bf16.msra.mxu0 0
        %371 = vmatprep.mubr.bf16.mxu0 0
        %372 = vmatmul.mubr.bf16.gmra.mrb[0].mxu0 %v337
        %v373 = vpop.f32.mrb[0].mxu0
        %v374 = vadd.f32 0.0, %v373
        %v375 = vpop.f32.mrb[0].mxu0
        %v376 = vpop.f32.mrb[0].mxu0
        %v377 = vpop.f32.mrb[0].mxu0
        %378 = vdwg.mxu0
        %v379 = vadd.f32 %v325, %v374
        %vm380 = vcmask 254976
        %381 = vst.msk [vmem:[#allocation2] sm:$0x3] %vm380, %v379
        %p382 = scmp.eq.s32.totalorder %s25, 1
        // Predicated region
        $region53: #{tpu_custom_call.1} parent=35 // pred_check
          %p383 = pneg %p382
        $region54: #{tpu_custom_call.1} parent=35 // pred_check_branch
          %385 = sbr.rel (%p383) target = $region56
        $region55: #{tpu_custom_call.1} parent=35 // pred_region
          %v386 = vld [vmem:[#allocation2] sm:$0x3]
          %v387 = vld [vmem:[#allocation8] sm:$0xff]
          %v388 = vld [vmem:[#allocation8 + $0x8] sm:$0xff]
          %v389 = vld [vmem:[#allocation8 + $0x10] sm:$0xff]
          %v390 = vld [vmem:[#allocation8 + $0x18] sm:$0xff]
          %v391 = vld [vmem:[%s3] sm:$0x1]
          %v393 = vlaneseq
          %v394 = vshrl.u32 %v393, 7
          %v395 = vsub.s32 0, %v394
          %v396 = vrot.slane %v391, %v395
          %vm398 = vcmask 261120
          %v400 = vsel %vm398, %v386, 0
          %402 = vmatprep.subr.mxu0 0.0
          %403 = vmatpush1.msra.mxu0 %v387
          %404 = vmatprep.subr.mxu0 0.0
          %405 = vmatpush1.msra.mxu0 %v388
          %406 = vmatprep.subr.mxu0 0.0
          %407 = vmatpush1.msra.mxu0 %v389
          %408 = vmatprep.subr.mxu0 0.0
          %409 = vmatpush1.msra.mxu0 %v390
          %410 = vmatprep.subr.mxu0 0.0
          %411 = vmatpush1.msra.mxu0 0.0
          %412 = vmatprep.subr.mxu0 0.0
          %413 = vmatpush1.msra.mxu0 0.0
          %414 = vmatprep.subr.mxu0 0.0
          %415 = vmatpush1.msra.mxu0 0.0
          %416 = vmatprep.subr.mxu0 0.0
          %417 = vmatpush1.msra.mxu0 0.0
          %418 = vmatprep.subr.mxu0 0.0
          %419 = vmatpush1.msra.mxu0 0.0
          %420 = vmatprep.subr.mxu0 0.0
          %421 = vmatpush1.msra.mxu0 0.0
          %422 = vmatprep.subr.mxu0 0.0
          %423 = vmatpush1.msra.mxu0 0.0
          %424 = vmatprep.subr.mxu0 0.0
          %425 = vmatpush1.msra.mxu0 0.0
          %426 = vmatprep.subr.mxu0 0.0
          %427 = vmatpush1.msra.mxu0 0.0
          %428 = vmatprep.subr.mxu0 0.0
          %429 = vmatpush1.msra.mxu0 0.0
          %430 = vmatprep.subr.mxu0 0.0
          %431 = vmatpush1.msra.mxu0 0.0
          %432 = vmatprep.subr.mxu0 0.0
          %433 = vmatpush1.msra.mxu0 0.0
          %434 = vmatprep.subr.mxu0 0.0
          %435 = vmatpush1.msra.mxu0 0.0
          %436 = vmatprep.subr.mxu0 0.0
          %437 = vmatpush1.msra.mxu0 0.0
          %438 = vmatprep.subr.mxu0 0.0
          %439 = vmatpush1.msra.mxu0 0.0
          %440 = vmatprep.subr.mxu0 0.0
          %441 = vmatpush1.msra.mxu0 0.0
          %442 = vmatprep.subr.mxu0 0.0
          %443 = vmatpush1.msra.mxu0 0.0
          %444 = vmatprep.subr.mxu0 0.0
          %445 = vmatpush1.msra.mxu0 0.0
          %446 = vmatprep.subr.mxu0 0.0
          %447 = vmatpush1.msra.mxu0 0.0
          %448 = vmatprep.subr.mxu0 0.0
          %449 = vmatpush1.msra.mxu0 0.0
          %450 = vmatprep.subr.mxu0 0.0
          %451 = vmatpush1.msra.mxu0 0.0
          %452 = vmatprep.subr.mxu0 0.0
          %453 = vmatpush1.msra.mxu0 0.0
          %454 = vmatprep.subr.mxu0 0.0
          %455 = vmatpush1.msra.mxu0 0.0
          %456 = vmatprep.subr.mxu0 0.0
          %457 = vmatpush1.msra.mxu0 0.0
          %458 = vmatprep.subr.mxu0 0.0
          %459 = vmatpush1.msra.mxu0 0.0
          %460 = vmatprep.subr.mxu0 0.0
          %461 = vmatpush1.msra.mxu0 0.0
          %462 = vmatprep.subr.mxu0 0.0
          %463 = vmatpush1.msra.mxu0 0.0
          %464 = vmatprep.subr.mxu0 0.0
          %465 = vmatpush1.msra.mxu0 0.0
          %466 = vmatprep.mubr.f32.mxu0 0.0
          %467 = vmatmul.mubr.f32.gmra.mrb[0].mxu0 %v400
          %v468 = vpop.f32.mrb[0].mxu0
          %v469 = vadd.f32 %v396, %v468
          %v470 = vpop.f32.mrb[0].mxu0
          %471 = vdwg.mxu0
          %vm472 = vcmask 1041408
          %v473 = vsel %vm472, %v469, -inf
          %474 = vmax.xlane.f32.xlu0 %v473
          %v475 = vpop.xlane.xlu0 %474
          %v476 = vsub.f32 %v469, %v475
          %v477 = vmul.f32 %v476, 1.442695
          %v478 = vpow.pop %v477
          %v479 = vsel %vm472, %v478, 0.0
          %480 = vadd.xlane.f32.xlu0 %v479
          %v481 = vpop.xlane.xlu0 %480
          %v482 = vrcp.pop %v481
          %v483 = vmul.f32 %v478, %v482
          %484 = vst [vmem:[#allocation9] sm:$0x3] %v483
        $region56: #{tpu_custom_call.1} parent=35 // pred_fallthru
          _
        // Predicated region
        $region57: #{tpu_custom_call.1} parent=35 // pred_check
          %p485 = pneg %p144
        $region58: #{tpu_custom_call.1} parent=35 // pred_check_branch
          %487 = sbr.rel (%p485) target = $region60
        $region59: #{tpu_custom_call.1} parent=35 // pred_region
          %s489 = ssub.s32 32, 32
          %490 = vsyncadd [#allocation5], %s489
          %s491 = smul.addr %s24, 32
          %s492 = scalar_lea.hbm %s4, %s491
          %s494 = sshll.u32 [#allocation9], 4
          %s495 = int_to_ptr.vmem [resolvable:$true] %s494
          %497 = dma.vmem_to_hbm [thread:$0]  %s495, 32, %s492, [#allocation5]
        $region60: #{tpu_custom_call.1} parent=35 // pred_fallthru
          _
        // Predicated region
        $region61: #{tpu_custom_call.1} parent=35 // pred_check
          %p498 = pneg %p144
        $region62: #{tpu_custom_call.1} parent=35 // pred_check_branch
          %500 = sbr.rel (%p498) target = $region64
        $region63: #{tpu_custom_call.1} parent=35 // pred_region
          %501 = dma.done [#allocation5], 32
        $region64: #{tpu_custom_call.1} parent=35 // pred_fallthru
          _
      $region36: #{tpu_custom_call.1} parent=5 // pred_fallthru
        _
      %p502 = scmp.le.s32.totalorder 2, %s15
      // Predicated region
      $region65: #{tpu_custom_call.1} parent=5 // pred_check
        %p503 = pneg %p502
      $region66: #{tpu_custom_call.1} parent=5 // pred_check_branch
        %505 = sbr.rel (%p503) target = $region68
      $region67: #{tpu_custom_call.1} parent=5 // pred_region
        %s506 = ssub.s32 %s15, 2
      $region68: #{tpu_custom_call.1} parent=5 // pred_fallthru
        _
    $region6: #{tpu_custom_call.1} parent=1 // loop_footer
      %s19 = sadd.s32 1, %s15
    $region7: #{tpu_custom_call.1} parent=1 // loop_footer_branch
      %14 = sbr.rel target = $region3
    $region8: #{tpu_custom_call.1} parent=1 // loop_exit
      _
    %507 = vsyncpa [#allocation4], 1
    %s508 = scalar_lea.sflag [#allocation4], 1
    %509 = vsyncpa %s508, 1
    %510 = vsyncpa [#allocation7], 1
    %s511 = scalar_lea.sflag [#allocation7], 1
    %512 = vsyncpa %s511, 1
    %513 = vsyncpa [#allocation5], 1
    %s514 = scalar_lea.sflag [#allocation5], 1
    %515 = vsyncpa %s514, 1

</llo_original>
